<compile_context>
chip_gen: v7x
topology: tpu7x:2x2x1
jax: 0.10.0
libtpu: 0.0.40
codegen_flags: <defaults>
</compile_context>

<pallas_src>
import functools

import jax
import jax.numpy as jnp
from jax.experimental import pallas as pl
from jax.experimental.pallas import tpu as pltpu

_FUSED_LIMIT_BYTES = 4 * 1024 * 1024    # keep x resident in VMEM below this size
_BLOCK_BUDGET_BYTES = 4 * 1024 * 1024   # streaming block target for the tiled path
_VMEM_LIMIT_BYTES = 32 * 1024 * 1024    # explicit scoped-VMEM limit (<= v7x's 64 MiB)


# --------------------------------------------------------------------------
# Fused fast path: stats + MLP + scale in one kernel, x resident in VMEM.
# --------------------------------------------------------------------------
def _fused_kernel(x_ref, w1_ref, b1_ref, w2_ref, b2_ref, o_ref, *, inv_hw):
    x = x_ref[...]                                       # (B, C, HW) streaming dtype
    xf = x.astype(jnp.float32)
    avg = jnp.sum(xf, axis=-1) * inv_hw                  # (B, C) f32
    mx = jnp.max(xf, axis=-1)                            # (B, C) f32
    p = jnp.concatenate([avg, mx], axis=0)               # (2B, C): both branches at once
    h = jnp.maximum(
        jnp.dot(p, w1_ref[...], preferred_element_type=jnp.float32) + b1_ref[...], 0.0)
    s = jax.nn.sigmoid(
        jnp.dot(h, w2_ref[...], preferred_element_type=jnp.float32) + b2_ref[...])
    nb = avg.shape[0]
    scale = s[:nb] + s[nb:]                              # (B, C) sigmoid(avg)+sigmoid(max)
    # Multiply in the streaming dtype (native bf16 on v6e/v7x); f32 stays f32.
    o_ref[...] = (x * scale[:, :, None].astype(x.dtype)).astype(o_ref.dtype)


# --------------------------------------------------------------------------
# Tiled path, pass 1: per-(b, c) sum & max over the HW axis (no masking --
# block shapes always divide the array exactly, so there is no padding).
# --------------------------------------------------------------------------
def _stats_kernel(x_ref, sum_ref, max_ref):
    @pl.when(pl.program_id(2) == 0)
    def _():
        sum_ref[...] = jnp.zeros(sum_ref.shape, jnp.float32)
        max_ref[...] = jnp.full(max_ref.shape, -jnp.inf, jnp.float32)

    x = x_ref[...].astype(jnp.float32)                   # (Bt, Ct, TK)
    sum_ref[...] += jnp.sum(x, axis=-1, keepdims=True)
    max_ref[...] = jnp.maximum(max_ref[...],
                               jnp.max(x, axis=-1, keepdims=True))


# --------------------------------------------------------------------------
# Tiled path, pass 2: lane-dense broadcast multiply by the per-channel scale.
# --------------------------------------------------------------------------
def _apply_kernel(x_ref, s_ref, o_ref):
    x = x_ref[...]                                       # (Bt, Ct, TK) streaming dtype
    s = s_ref[...].astype(x.dtype)                       # (Bt, Ct, 1)
    o_ref[...] = (x * s).astype(o_ref.dtype)


# --------------------------------------------------------------------------
# Block-size selection for the tiled path.
# --------------------------------------------------------------------------
def _largest_aligned_divisor(n, quantum, limit):
    """Largest d with d % quantum == 0, n % d == 0 and d <= limit (None if none)."""
    if limit <= 0:
        return None
    best = None
    d = quantum
    cap = min(n, limit)
    while d <= cap:
        if n % d == 0:
            best = d
        d += quantum
    return best


def _largest_divisor_at_most(n, limit):
    for d in range(min(n, max(1, limit)), 0, -1):
        if n % d == 0:
            return d
    return 1


def _choose_blocks(B, C, HW, itemsize, block_budget_bytes):
    """Pick (Bt, Ct, TK) so last two block dims are (sub,128)-aligned or full dims."""
    sub = max(8, (8 * 4) // max(1, itemsize))        # 8 f32 / 16 bf16 / 32 int8-fp8
    budget_elems = max(1, block_budget_bytes // itemsize)

    if C * HW <= budget_elems:
        # Full (C, HW) slab fits: pack several batches per block if possible.
        Ct, TK = C, HW
        Bt = _largest_divisor_at_most(B, max(1, budget_elems // (C * HW)))
    elif HW % 128 == 0:
        tk = _largest_aligned_divisor(HW, 128, budget_elems // C)
        if tk is not None:
            Ct, TK, Bt = C, tk, 1
        else:
            # Even a 128-wide tile with full C is too big: split C as well.
            ct = _largest_aligned_divisor(C, sub, budget_elems // 128)
            if ct is None:
                ct = C  # TODO(synk): C has no sublane-aligned divisor; block > budget
            tk = _largest_aligned_divisor(HW, 128, max(128, budget_elems // ct))
            Ct, TK, Bt = ct, (tk if tk is not None else 128), 1
    else:
        # HW not 128-aligned: keep the full HW extent (legal for any HW) and
        # split the channel axis instead; no padding, no masking.
        ct = _largest_aligned_divisor(C, sub, budget_elems // HW)
        if ct is None:
            ct = C  # TODO(synk): very large unaligned (C,HW) slab; may exceed budget
        Ct, TK, Bt = ct, HW, 1

    # v7x has 2 TensorCores sharded over the parallel grid axes: keep >= 2 blocks.
    if B // Bt == 1 and C // Ct == 1:
        if B > 1:
            Bt = _largest_divisor_at_most(B, B // 2)
        else:
            half = _largest_aligned_divisor(C, sub, C // 2)
            if half is not None:
                Ct = half
    return Bt, Ct, TK


# --------------------------------------------------------------------------
# Wrapper.
# --------------------------------------------------------------------------
def cdca_channel_attention(x, conv1_w, conv1_b, conv2_w, conv2_b,
                           *, fused_limit_bytes=_FUSED_LIMIT_BYTES,
                           block_budget_bytes=_BLOCK_BUDGET_BYTES):
    """x: (B, C, H, W); conv1_w: (I, C, 3, 3); conv2_w: (C, I, 1, 1)."""
    B, C, H, W = x.shape
    I = conv1_w.shape[0]
    HW = H * W
    itemsize = x.dtype.itemsize

    # Pre-transposed weights (no in-kernel transposes).  The centre-tap-only
    # treatment of conv1 is valid ONLY because it is applied to a 1x1 pooled
    # map with zero padding (matches the PyTorch module).
    w1 = jnp.transpose(conv1_w[:, :, 1, 1]).astype(jnp.float32)     # (C, I)
    w2 = jnp.transpose(conv2_w[:, :, 0, 0]).astype(jnp.float32)     # (I, C)
    b1 = conv1_b.reshape(1, I).astype(jnp.float32)
    b2 = conv2_b.reshape(1, C).astype(jnp.float32)

    x3 = x.reshape(B, C, HW)                                        # free reshape
    total_bytes = B * C * HW * itemsize

    # ---------------- fused fast path ----------------
    if total_bytes <= fused_limit_bytes:
        out3 = pl.pallas_call(
            functools.partial(_fused_kernel, inv_hw=1.0 / HW),
            out_shape=jax.ShapeDtypeStruct((B, C, HW), x.dtype),
            in_specs=[pl.BlockSpec(memory_space=pltpu.MemorySpace.VMEM)] * 5,
            out_specs=pl.BlockSpec(memory_space=pltpu.MemorySpace.VMEM),
            compiler_params=pltpu.CompilerParams(
                vmem_limit_bytes=_VMEM_LIMIT_BYTES),
            cost_estimate=pl.CostEstimate(
                flops=3 * B * C * HW + 8 * B * C * I,
                transcendentals=2 * B * C,
                bytes_accessed=2 * B * C * HW * itemsize + (2 * C * I + I + C) * 4),
        )(x3, w1, b1, w2, b2)
        return out3.reshape(B, C, H, W)

    # ---------------- tiled streaming path ----------------
    Bt, Ct, TK = _choose_blocks(B, C, HW, itemsize, block_budget_bytes)
    grid = (B // Bt, C // Ct, HW // TK)
    block_bytes = Bt * Ct * TK * itemsize
    vmem_limit = max(_VMEM_LIMIT_BYTES, 4 * block_bytes + (4 << 20))

    # pass 1: pooled statistics
    sums, maxes = pl.pallas_call(
        _stats_kernel,
        out_shape=(jax.ShapeDtypeStruct((B, C, 1), jnp.float32),
                   jax.ShapeDtypeStruct((B, C, 1), jnp.float32)),
        grid_spec=pltpu.PrefetchScalarGridSpec(
            num_scalar_prefetch=0,
            grid=grid,
            in_specs=[pl.BlockSpec((Bt, Ct, TK), lambda b, c, k: (b, c, k))],
            out_specs=[pl.BlockSpec((Bt, Ct, 1), lambda b, c, k: (b, c, 0)),
                       pl.BlockSpec((Bt, Ct, 1), lambda b, c, k: (b, c, 0))],
        ),
        compiler_params=pltpu.CompilerParams(
            dimension_semantics=("parallel", "parallel", "arbitrary"),
            vmem_limit_bytes=vmem_limit),
        cost_estimate=pl.CostEstimate(
            flops=2 * B * C * HW, transcendentals=0,
            bytes_accessed=B * C * HW * itemsize + 8 * B * C),
    )(x3)

    # tiny two-branch MLP -> per-channel scale.  Shapes are far below MXU tile
    # size; plain XLA avoids an extra kernel dispatch + HBM round-trips.
    avg = sums[..., 0] * (1.0 / HW)                     # (B, C) f32
    p = jnp.concatenate([avg, maxes[..., 0]], axis=0)   # (2B, C): both branches at once
    h = jnp.maximum(p @ w1 + b1, 0.0)
    s = jax.nn.sigmoid(h @ w2 + b2)
    scale = (s[:B] + s[B:]).reshape(B, C, 1).astype(jnp.float32)

    # pass 2: broadcast multiply
    out3 = pl.pallas_call(
        _apply_kernel,
        out_shape=jax.ShapeDtypeStruct((B, C, HW), x.dtype),
        grid_spec=pltpu.PrefetchScalarGridSpec(
            num_scalar_prefetch=0,
            grid=grid,
            in_specs=[pl.BlockSpec((Bt, Ct, TK), lambda b, c, k: (b, c, k)),
                      pl.BlockSpec((Bt, Ct, 1), lambda b, c, k: (b, c, 0))],
            out_specs=pl.BlockSpec((Bt, Ct, TK), lambda b, c, k: (b, c, k)),
        ),
        compiler_params=pltpu.CompilerParams(
            dimension_semantics=("parallel", "parallel", "parallel"),
            vmem_limit_bytes=vmem_limit),
        cost_estimate=pl.CostEstimate(
            flops=B * C * HW, transcendentals=0,
            bytes_accessed=2 * B * C * HW * itemsize + 4 * B * C),
    )(x3, scale)
    return out3.reshape(B, C, H, W)


# --------------------------------------------------------------------------
# Pure-JAX reference of the PyTorch forward (for verification).
# --------------------------------------------------------------------------
def reference(x, conv1_w, conv1_b, conv2_w, conv2_b):
    w1c = conv1_w[:, :, 1, 1]
    w2c = conv2_w[:, :, 0, 0]

    def branch(p):                                      # p: (B, C)
        h = jax.nn.relu(p @ w1c.T + conv1_b)
        return jax.nn.sigmoid(h @ w2c.T + conv2_b)

    xf = x.astype(jnp.float32)
    avg = jnp.mean(xf, axis=(2, 3))
    mx = jnp.max(xf, axis=(2, 3))
    scale = branch(avg) + branch(mx)                    # (B, C)
    return (xf * scale[:, :, None, None]).astype(x.dtype)


if __name__ == "__main__":
    keys = jax.random.split(jax.random.PRNGKey(0), 5)

    def make_inputs(k, B, C, I, H, W, dtype=jnp.float32):
        kx, k1, k2, k3, k4 = jax.random.split(k, 5)
        x = jax.random.normal(kx, (B, C, H, W), dtype=dtype)
        conv1_w = 0.1 * jax.random.normal(k1, (I, C, 3, 3), dtype=jnp.float32)
        conv1_b = 0.1 * jax.random.normal(k2, (I,), dtype=jnp.float32)
        conv2_w = 0.1 * jax.random.normal(k3, (C, I, 1, 1), dtype=jnp.float32)
        conv2_b = 0.1 * jax.random.normal(k4, (C,), dtype=jnp.float32)
        return x, conv1_w, conv1_b, conv2_w, conv2_b

    # 1) Primary shape (module-consistent): exercises the fused single-kernel path.
    args = make_inputs(keys[0], B=2, C=4, I=8, H=16, W=16)
    out = jax.block_until_ready(cdca_channel_attention(*args))
    assert out.shape == args[0].shape
    assert jnp.allclose(out, reference(*args), atol=1e-5, rtol=1e-5)

    # 2) Forced tiled path, 128-aligned HW, single reduction step.
    args = make_inputs(keys[1], B=2, C=8, I=4, H=16, W=16)
    out = jax.block_until_ready(cdca_channel_attention(*args, fused_limit_bytes=0))
    assert jnp.allclose(out, reference(*args), atol=1e-5, rtol=1e-5)

    # 3) Forced tiled path, HW not a multiple of 128 (full-HW blocks, no padding).
    args = make_inputs(keys[2], B=2, C=8, I=4, H=10, W=10)
    out = jax.block_until_ready(cdca_channel_attention(*args, fused_limit_bytes=0))
    assert jnp.allclose(out, reference(*args), atol=1e-5, rtol=1e-5)

    # 4) Forced tiled path with HW split into several reduction steps.
    args = make_inputs(keys[3], B=2, C=8, I=4, H=32, W=32)
    out = jax.block_until_ready(cdca_channel_attention(
        *args, fused_limit_bytes=0, block_budget_bytes=8 * 1024))
    assert jnp.allclose(out, reference(*args), atol=1e-5, rtol=1e-5)

    # 5) Forced tiled path with the channel axis split (unaligned HW).
    args = make_inputs(keys[4], B=1, C=16, I=4, H=10, W=10)
    out = jax.block_until_ready(cdca_channel_attention(
        *args, fused_limit_bytes=0, block_budget_bytes=4 * 1024))
    assert jnp.allclose(out, reference(*args), atol=1e-5, rtol=1e-5)

    print("KERNEL_OK")
</pallas_src>

<mosaic_0001>
module attributes {stable_mosaic.version = 11 : i64} {
  func.func @_fused_kernel(%arg0: memref<2x4x256xf32, #tpu.memory_space<vmem>>, %arg1: memref<4x8xf32, #tpu.memory_space<vmem>>, %arg2: memref<1x8xf32, #tpu.memory_space<vmem>>, %arg3: memref<8x4xf32, #tpu.memory_space<vmem>>, %arg4: memref<1x4xf32, #tpu.memory_space<vmem>>, %arg5: memref<2x4x256xf32, #tpu.memory_space<vmem>>) attributes {dimension_semantics = [], scalar_prefetch = 0 : i64, scratch_operands = 0 : i64, tpu.core_type = #tpu.core_type<tc>} {
    %c0 = arith.constant 0 : index
    %c0_0 = arith.constant 0 : index
    %c0_1 = arith.constant 0 : index
    %0 = vector.load %arg0[%c0, %c0_0, %c0_1] : memref<2x4x256xf32, #tpu.memory_space<vmem>>, vector<2x4x256xf32>
    %cst = arith.constant dense<0.000000e+00> : vector<2x4xf32>
    %1 = vector.multi_reduction <add>, %0, %cst [2] : vector<2x4x256xf32> to vector<2x4xf32>
    %cst_2 = arith.constant 3.906250e-03 : f32
    %2 = vector.broadcast %cst_2 : f32 to vector<2x4xf32>
    %3 = arith.mulf %1, %2 : vector<2x4xf32>
    %cst_3 = arith.constant dense<0xFF800000> : vector<2x4xf32>
    %4 = vector.multi_reduction <maximumf>, %0, %cst_3 [2] : vector<2x4x256xf32> to vector<2x4xf32>
    %5 = tpu.concatenate %3, %4 in 0 : vector<2x4xf32>, vector<2x4xf32> -> vector<4x4xf32>
    %c0_4 = arith.constant 0 : index
    %c0_5 = arith.constant 0 : index
    %6 = vector.load %arg1[%c0_4, %c0_5] : memref<4x8xf32, #tpu.memory_space<vmem>>, vector<4x8xf32>
    %cst_6 = arith.constant dense<0.000000e+00> : vector<4x8xf32>
    %7 = tpu.matmul %5, %6, %cst_6 {dimension_numbers = #tpu.dot_dimension_numbers<[1], [0], [0], [1], [0, 0, 1, 1], [], []>} : vector<4x4xf32>, vector<4x8xf32>, vector<4x8xf32> -> vector<4x8xf32>
    %c0_7 = arith.constant 0 : index
    %c0_8 = arith.constant 0 : index
    %8 = vector.load %arg2[%c0_7, %c0_8] : memref<1x8xf32, #tpu.memory_space<vmem>>, vector<1x8xf32>
    %9 = vector.broadcast %8 : vector<1x8xf32> to vector<4x8xf32>
    %10 = arith.addf %7, %9 : vector<4x8xf32>
    %cst_9 = arith.constant 0.000000e+00 : f32
    %11 = vector.broadcast %cst_9 : f32 to vector<4x8xf32>
    %12 = arith.maximumf %10, %11 : vector<4x8xf32>
    %c0_10 = arith.constant 0 : index
    %c0_11 = arith.constant 0 : index
    %13 = vector.load %arg3[%c0_10, %c0_11] : memref<8x4xf32, #tpu.memory_space<vmem>>, vector<8x4xf32>
    %cst_12 = arith.constant dense<0.000000e+00> : vector<4x4xf32>
    %14 = tpu.matmul %12, %13, %cst_12 {dimension_numbers = #tpu.dot_dimension_numbers<[1], [0], [0], [1], [0, 0, 1, 1], [], []>} : vector<4x8xf32>, vector<8x4xf32>, vector<4x4xf32> -> vector<4x4xf32>
    %c0_13 = arith.constant 0 : index
    %c0_14 = arith.constant 0 : index
    %15 = vector.load %arg4[%c0_13, %c0_14] : memref<1x4xf32, #tpu.memory_space<vmem>>, vector<1x4xf32>
    %16 = vector.broadcast %15 : vector<1x4xf32> to vector<4x4xf32>
    %17 = arith.addf %14, %16 : vector<4x4xf32>
    %18 = arith.negf %17 : vector<4x4xf32>
    %19 = math.exp %18 : vector<4x4xf32>
    %cst_15 = arith.constant 1.000000e+00 : f32
    %20 = vector.broadcast %cst_15 : f32 to vector<4x4xf32>
    %21 = arith.addf %20, %19 : vector<4x4xf32>
    %22 = arith.divf %20, %21 : vector<4x4xf32>
    %23 = vector.extract_strided_slice %22 {offsets = [0, 0], sizes = [2, 4], strides = [1, 1]} : vector<4x4xf32> to vector<2x4xf32>
    %24 = vector.extract_strided_slice %22 {offsets = [2, 0], sizes = [2, 4], strides = [1, 1]} : vector<4x4xf32> to vector<2x4xf32>
    %25 = arith.addf %23, %24 : vector<2x4xf32>
    %26 = vector.shape_cast %25 : vector<2x4xf32> to vector<2x4x1xf32>
    %27 = vector.broadcast %26 : vector<2x4x1xf32> to vector<2x4x256xf32>
    %28 = arith.mulf %0, %27 : vector<2x4x256xf32>
    %c0_16 = arith.constant 0 : index
    %c0_17 = arith.constant 0 : index
    %c0_18 = arith.constant 0 : index
    %29 = vector.load %arg5[%c0_16, %c0_17, %c0_18] : memref<2x4x256xf32, #tpu.memory_space<vmem>>, vector<2x4x256xf32>
    tpu.vector_store %arg5[%c0_16, %c0_17, %c0_18], %28 {strides = array<i32>} : memref<2x4x256xf32, #tpu.memory_space<vmem>>, vector<2x4x256xf32>,
    return
  }
}

</mosaic_0001>

<llo_original>
// kernel: tpu_custom_call.1
$region0: #{tpu_custom_call.1}
  #allocation0 [shape = 'u32[]', space=smem, size = 0x4, offset = 0x4, fixed_abs, tag = 'smem constant byte address 0x4 - core index']
  #allocation1 [shape = 'u32[144,128]{1,0:T(1,128)}', space=vmem, size = 0x12000, scoped, tag = 'internal scratch']
  %s0 = inlined_call_operand.hbm [shape: f32[2,4,256], index: 0, kind: input, shape index: {}]
  %s1 = inlined_call_operand.vmem [shape: f32[4,8], index: 1, kind: input, shape index: {}]
  %s2 = inlined_call_operand.vmem [shape: f32[1,8], index: 2, kind: input, shape index: {}]
  %s3 = inlined_call_operand.vmem [shape: f32[8,4], index: 3, kind: input, shape index: {}]
  %s4 = inlined_call_operand.vmem [shape: f32[1,4], index: 4, kind: input, shape index: {}]
  %s5 = inlined_call_operand.hbm [shape: f32[2,4,256], index: 5, kind: output, shape index: {}]
  %s6 = sld [smem:[#allocation0]]
  $region34: #{tpu_custom_call.1} parent=0
    _
  %s8 = ssub.s32 1, %s6
  %s9 = scalar_select 0, %s8, %s6
  $region1: #{tpu_custom_call.1} parent=0
    #allocation2 [shape = 'u8[8192]{0}', space=vmem, size = 0x2000, scoped, tag = 'input window, operand 0, single buffered']
    #allocation3 [shape = 's32[1]{0}', space=sflag, size = 0x4, scoped, tag = 'scoped memory for tpu_custom_call.1']
    #allocation4 [shape = 's32[1]{0}', space=sflag, size = 0x4, scoped, tag = 'scoped memory for tpu_custom_call.1']
    #allocation5 [shape = 'u8[8192]{0}', space=vmem, size = 0x2000, scoped, tag = 'output window, operand 0, single buffered']
    %10 = vsyncpa [#allocation3], 0
    %11 = vsyncpa [#allocation4], 0
    // Predicated region
    $region2: #{tpu_custom_call.1} parent=1 // pred_check
      _
    $region3: #{tpu_custom_call.1} parent=1 // pred_check_branch
      %13 = sbr.rel (0) target = $region5
    $region4: #{tpu_custom_call.1} parent=1 // pred_region
      %s15 = ssub.s32 256, 256
      %16 = vsyncadd [#allocation3], %s15
      %s17 = sshll.u32 [#allocation2], 4
      %s18 = int_to_ptr.vmem [resolvable:$true] %s17
      %23 = dma.hbm_to_vmem [thread:$0]  %s0, 256, %s18, [#allocation3], 128, 128, 8
    $region5: #{tpu_custom_call.1} parent=1 // pred_fallthru
      _
    // Predicated region
    $region6: #{tpu_custom_call.1} parent=1 // pred_check
      _
    $region7: #{tpu_custom_call.1} parent=1 // pred_check_branch
      %25 = sbr.rel (0) target = $region9
    $region8: #{tpu_custom_call.1} parent=1 // pred_region
      _
    $region9: #{tpu_custom_call.1} parent=1 // pred_fallthru
      _
    // Predicated region
    $region10: #{tpu_custom_call.1} parent=1 // pred_check
      _
    $region11: #{tpu_custom_call.1} parent=1 // pred_check_branch
      %27 = sbr.rel (0) target = $region13
    $region12: #{tpu_custom_call.1} parent=1 // pred_region
      _
    $region13: #{tpu_custom_call.1} parent=1 // pred_fallthru
      _
    // Predicated region
    $region14: #{tpu_custom_call.1} parent=1 // pred_check
      _
    $region15: #{tpu_custom_call.1} parent=1 // pred_check_branch
      %29 = sbr.rel (0) target = $region17
    $region16: #{tpu_custom_call.1} parent=1 // pred_region
      _
    $region17: #{tpu_custom_call.1} parent=1 // pred_fallthru
      _
    // Predicated region
    $region18: #{tpu_custom_call.1} parent=1 // pred_check
      _
    $region19: #{tpu_custom_call.1} parent=1 // pred_check_branch
      %31 = sbr.rel (0) target = $region21
    $region20: #{tpu_custom_call.1} parent=1 // pred_region
      _
    $region21: #{tpu_custom_call.1} parent=1 // pred_fallthru
      _
    // Predicated region
    $region22: #{tpu_custom_call.1} parent=1 // pred_check
      _
    $region23: #{tpu_custom_call.1} parent=1 // pred_check_branch
      %33 = sbr.rel (0) target = $region25
    $region24: #{tpu_custom_call.1} parent=1 // pred_region
      %34 = dma.done [#allocation3], 256
    $region25: #{tpu_custom_call.1} parent=1 // pred_fallthru
      _
    %v35 = vld [vmem:[#allocation2] sm:$0xff]
    %v36 = vld [vmem:[#allocation2 + $0x8] sm:$0xff]
    %v39 = vcombine.high %v35, %v35
    %v40 = vcombine.high %v36, %v36
    %vm43 = vcmask 1043456
    %v44 = vsel %vm43, %v35, 0.0
    %v45 = vsel %vm43, %v39, 0.0
    %v46 = vadd.f32 %v44, %v45
    %47 = vadd.xlane.f32.xlu0 %v46
    %v48 = vpop.xlane.xlu0 %47
    %v49 = vsel %vm43, %v36, 0.0
    %v50 = vsel %vm43, %v40, 0.0
    %v51 = vadd.f32 %v49, %v50
    %52 = vadd.xlane.f32.xlu0 %v51
    %v53 = vpop.xlane.xlu0 %52
    %v54 = vmul.f32 %v48, 0.00390625
    %v55 = vmul.f32 %v53, 0.00390625
    %v56 = vsel %vm43, %v35, -inf
    %v57 = vsel %vm43, %v39, -inf
    %v58 = vmax.f32 %v56, %v57
    %59 = vmax.xlane.f32.xlu0 %v58
    %v60 = vpop.xlane.xlu0 %59
    %v61 = vsel %vm43, %v36, -inf
    %v62 = vsel %vm43, %v40, -inf
    %v63 = vmax.f32 %v61, %v62
    %64 = vmax.xlane.f32.xlu0 %v63
    %v65 = vpop.xlane.xlu0 %64
    %v68 = vlaneseq
    %v69 = vand.u32 %v68, 127
    %v70 = vlaneseq
    %v71 = vshrl.u32 %v70, 7
    %v72 = vsub.s32 %v69, %v71
    %v73 = vrot.slane %v54, %v72
    %v74 = vlaneseq
    %v75 = vshrl.u32 %v74, 7
    %v76 = vsub.s32 %v69, %v75
    %v77 = vrot.slane %v55, %v76
    %vm78 = vcmask 1041409
    %v79 = vsel %vm78, %v77, %v73
    %v83 = vlaneseq
    %v84 = vshrl.u32 %v83, 7
    %v85 = vsub.s32 %v69, %v84
    %v86 = vrot.slane %v60, %v85
    %v87 = vlaneseq
    %v88 = vshrl.u32 %v87, 7
    %v89 = vsub.s32 %v69, %v88
    %v90 = vrot.slane %v65, %v89
    %vm91 = vcmask 1043459
    %v92 = vsel %vm91, %v90, %v86
    %vm94 = vcmask 1041408
    %v95 = vsel %vm94, %v79, %v92
    %v96 = vld [vmem:[%s1] sm:$0xf]
    %v97 = vld [vmem:[%s2] sm:$0x1]
    %v99 = vlaneseq
    %v100 = vshrl.u32 %v99, 7
    %v101 = vsub.s32 0, %v100
    %v102 = vrot.slane %v97, %v101
    %vm104 = vcmask 31744
    %v106 = vsel %vm104, %v95, 0
    %v109 = vsel %vm43, %v96, 0
    %111 = vmatprep.subr.mxu0 0.0
    %112 = vmatpush1.msra.mxu0 %v109
    %113 = vmatprep.subr.mxu0 0.0
    %114 = vmatpush1.msra.mxu0 0.0
    %115 = vmatprep.subr.mxu0 0.0
    %116 = vmatpush1.msra.mxu0 0.0
    %117 = vmatprep.subr.mxu0 0.0
    %118 = vmatpush1.msra.mxu0 0.0
    %119 = vmatprep.subr.mxu0 0.0
    %120 = vmatpush1.msra.mxu0 0.0
    %121 = vmatprep.subr.mxu0 0.0
    %122 = vmatpush1.msra.mxu0 0.0
    %123 = vmatprep.subr.mxu0 0.0
    %124 = vmatpush1.msra.mxu0 0.0
    %125 = vmatprep.subr.mxu0 0.0
    %126 = vmatpush1.msra.mxu0 0.0
    %127 = vmatprep.subr.mxu0 0.0
    %128 = vmatpush1.msra.mxu0 0.0
    %129 = vmatprep.subr.mxu0 0.0
    %130 = vmatpush1.msra.mxu0 0.0
    %131 = vmatprep.subr.mxu0 0.0
    %132 = vmatpush1.msra.mxu0 0.0
    %133 = vmatprep.subr.mxu0 0.0
    %134 = vmatpush1.msra.mxu0 0.0
    %135 = vmatprep.subr.mxu0 0.0
    %136 = vmatpush1.msra.mxu0 0.0
    %137 = vmatprep.subr.mxu0 0.0
    %138 = vmatpush1.msra.mxu0 0.0
    %139 = vmatprep.subr.mxu0 0.0
    %140 = vmatpush1.msra.mxu0 0.0
    %141 = vmatprep.subr.mxu0 0.0
    %142 = vmatpush1.msra.mxu0 0.0
    %143 = vmatprep.subr.mxu0 0.0
    %144 = vmatpush1.msra.mxu0 0.0
    %145 = vmatprep.subr.mxu0 0.0
    %146 = vmatpush1.msra.mxu0 0.0
    %147 = vmatprep.subr.mxu0 0.0
    %148 = vmatpush1.msra.mxu0 0.0
    %149 = vmatprep.subr.mxu0 0.0
    %150 = vmatpush1.msra.mxu0 0.0
    %151 = vmatprep.subr.mxu0 0.0
    %152 = vmatpush1.msra.mxu0 0.0
    %153 = vmatprep.subr.mxu0 0.0
    %154 = vmatpush1.msra.mxu0 0.0
    %155 = vmatprep.subr.mxu0 0.0
    %156 = vmatpush1.msra.mxu0 0.0
    %157 = vmatprep.subr.mxu0 0.0
    %158 = vmatpush1.msra.mxu0 0.0
    %159 = vmatprep.subr.mxu0 0.0
    %160 = vmatpush1.msra.mxu0 0.0
    %161 = vmatprep.subr.mxu0 0.0
    %162 = vmatpush1.msra.mxu0 0.0
    %163 = vmatprep.subr.mxu0 0.0
    %164 = vmatpush1.msra.mxu0 0.0
    %165 = vmatprep.subr.mxu0 0.0
    %166 = vmatpush1.msra.mxu0 0.0
    %167 = vmatprep.subr.mxu0 0.0
    %168 = vmatpush1.msra.mxu0 0.0
    %169 = vmatprep.subr.mxu0 0.0
    %170 = vmatpush1.msra.mxu0 0.0
    %171 = vmatprep.subr.mxu0 0.0
    %172 = vmatpush1.msra.mxu0 0.0
    %173 = vmatprep.subr.mxu0 0.0
    %174 = vmatpush1.msra.mxu0 0.0
    %175 = vmatprep.mubr.f32.mxu0 0.0
    %176 = vmatmul.mubr.f32.gmra.mrb[0].mxu0 %v106
    %v177 = vpop.f32.mrb[0].mxu0
    %v178 = vadd.f32 %v102, %v177
    %v179 = vpop.f32.mrb[0].mxu0
    %180 = vdwg.mxu0
    %v181 = vmax.f32 %v178, 0.0
    %v182 = vld [vmem:[%s3] sm:$0xff]
    %v183 = vld [vmem:[%s4] sm:$0x1]
    %v185 = vlaneseq
    %v186 = vshrl.u32 %v185, 7
    %v187 = vsub.s32 0, %v186
    %v188 = vrot.slane %v183, %v187
    %vm190 = vcmask 64512
    %v192 = vsel %vm190, %v181, 0
    %194 = vmatprep.subr.mxu0 0.0
    %195 = vmatpush1.msra.mxu0 %v182
    %196 = vmatprep.subr.mxu0 0.0
    %197 = vmatpush1.msra.mxu0 0.0
    %198 = vmatprep.subr.mxu0 0.0
    %199 = vmatpush1.msra.mxu0 0.0
    %200 = vmatprep.subr.mxu0 0.0
    %201 = vmatpush1.msra.mxu0 0.0
    %202 = vmatprep.subr.mxu0 0.0
    %203 = vmatpush1.msra.mxu0 0.0
    %204 = vmatprep.subr.mxu0 0.0
    %205 = vmatpush1.msra.mxu0 0.0
    %206 = vmatprep.subr.mxu0 0.0
    %207 = vmatpush1.msra.mxu0 0.0
    %208 = vmatprep.subr.mxu0 0.0
    %209 = vmatpush1.msra.mxu0 0.0
    %210 = vmatprep.subr.mxu0 0.0
    %211 = vmatpush1.msra.mxu0 0.0
    %212 = vmatprep.subr.mxu0 0.0
    %213 = vmatpush1.msra.mxu0 0.0
    %214 = vmatprep.subr.mxu0 0.0
    %215 = vmatpush1.msra.mxu0 0.0
    %216 = vmatprep.subr.mxu0 0.0
    %217 = vmatpush1.msra.mxu0 0.0
    %218 = vmatprep.subr.mxu0 0.0
    %219 = vmatpush1.msra.mxu0 0.0
    %220 = vmatprep.subr.mxu0 0.0
    %221 = vmatpush1.msra.mxu0 0.0
    %222 = vmatprep.subr.mxu0 0.0
    %223 = vmatpush1.msra.mxu0 0.0
    %224 = vmatprep.subr.mxu0 0.0
    %225 = vmatpush1.msra.mxu0 0.0
    %226 = vmatprep.subr.mxu0 0.0
    %227 = vmatpush1.msra.mxu0 0.0
    %228 = vmatprep.subr.mxu0 0.0
    %229 = vmatpush1.msra.mxu0 0.0
    %230 = vmatprep.subr.mxu0 0.0
    %231 = vmatpush1.msra.mxu0 0.0
    %232 = vmatprep.subr.mxu0 0.0
    %233 = vmatpush1.msra.mxu0 0.0
    %234 = vmatprep.subr.mxu0 0.0
    %235 = vmatpush1.msra.mxu0 0.0
    %236 = vmatprep.subr.mxu0 0.0
    %237 = vmatpush1.msra.mxu0 0.0
    %238 = vmatprep.subr.mxu0 0.0
    %239 = vmatpush1.msra.mxu0 0.0
    %240 = vmatprep.subr.mxu0 0.0
    %241 = vmatpush1.msra.mxu0 0.0
    %242 = vmatprep.subr.mxu0 0.0
    %243 = vmatpush1.msra.mxu0 0.0
    %244 = vmatprep.subr.mxu0 0.0
    %245 = vmatpush1.msra.mxu0 0.0
    %246 = vmatprep.subr.mxu0 0.0
    %247 = vmatpush1.msra.mxu0 0.0
    %248 = vmatprep.subr.mxu0 0.0
    %249 = vmatpush1.msra.mxu0 0.0
    %250 = vmatprep.subr.mxu0 0.0
    %251 = vmatpush1.msra.mxu0 0.0
    %252 = vmatprep.subr.mxu0 0.0
    %253 = vmatpush1.msra.mxu0 0.0
    %254 = vmatprep.subr.mxu0 0.0
    %255 = vmatpush1.msra.mxu0 0.0
    %256 = vmatprep.subr.mxu0 0.0
    %257 = vmatpush1.msra.mxu0 0.0
    %258 = vmatprep.mubr.f32.mxu0 0.0
    %259 = vmatmul.mubr.f32.gmra.mrb[0].mxu0 %v192
    %v260 = vpop.f32.mrb[0].mxu0
    %v261 = vadd.f32 %v188, %v260
    %v262 = vpop.f32.mrb[0].mxu0
    %263 = vdwg.mxu0
    %v264 = vxor.u32 %v261, 2147483648
    %v265 = vmul.f32 %v264, 1.442695
    %v266 = vpow.pop %v265
    %v267 = vadd.f32 %v266, 1.0
    %v268 = vrcp.pop %v267
    %v269 = vmul.f32 1.0, %v268
    %v271 = vrot.slane %v269, 2
    %v273 = vadd.f32 %v269, %v271
    %v274 = vlaneseq
    %v275 = vshrl.u32 %v274, 7
    %v276 = vsub.s32 0, %v275
    %v277 = vrot.slane %v273, %v276
    %279 = vbcast.lane.b32.xlu0 %v277, 256
    %v280 = vpop.permute.xlu0 %279
    %v281 = vlaneseq
    %v282 = vshrl.u32 %v281, 7
    %v283 = vsub.s32 1, %v282
    %v284 = vrot.slane %v273, %v283
    %286 = vbcast.lane.b32.xlu0 %v284, 256
    %v287 = vpop.permute.xlu0 %286
    %v291 = vunpack.c.l.s4 839922192
    %v292 = vunpack.c.0.s8 %v291
    %v293 = vlaneseq
    %v294 = vshrl.u32 %v293, 7
    %v295 = vsub.s32 %v292, %v294
    %v296 = vrot.slane %v280, %v295
    %v298 = vunpack.c.l.s4 839922192
    %v299 = vunpack.c.0.s8 %v298
    %v300 = vlaneseq
    %v301 = vshrl.u32 %v300, 7
    %v302 = vsub.s32 %v299, %v301
    %v303 = vrot.slane %v287, %v302
    %v306 = vmul.f32 %v35, %v296
    %v307 = vmul.f32 %v36, %v303
    %308 = vst [vmem:[#allocation5] sm:$0xff] %v306
    %309 = vst [vmem:[#allocation5 + $0x8] sm:$0xff] %v307
    // Predicated region
    $region26: #{tpu_custom_call.1} parent=1 // pred_check
      _
    $region27: #{tpu_custom_call.1} parent=1 // pred_check_branch
      %311 = sbr.rel (0) target = $region29
    $region28: #{tpu_custom_call.1} parent=1 // pred_region
      %s313 = ssub.s32 256, 256
      %314 = vsyncadd [#allocation4], %s313
      %s315 = sshll.u32 [#allocation5], 4
      %s316 = int_to_ptr.vmem [resolvable:$true] %s315
      %321 = dma.vmem_to_hbm [thread:$0]  %s316, 256, %s5, [#allocation4], 128, 128, 8
    $region29: #{tpu_custom_call.1} parent=1 // pred_fallthru
      _
    // Predicated region
    $region30: #{tpu_custom_call.1} parent=1 // pred_check
      _
    $region31: #{tpu_custom_call.1} parent=1 // pred_check_branch
      %323 = sbr.rel (0) target = $region33
    $region32: #{tpu_custom_call.1} parent=1 // pred_region
      %324 = dma.done [#allocation4], 256
    $region33: #{tpu_custom_call.1} parent=1 // pred_fallthru
      _
    %325 = vsyncpa [#allocation3], 1
    %326 = vsyncpa [#allocation4], 1

</llo_original>
